<compile_context>
chip_gen: v7x
topology: tpu7x:2x2x1
jax: 0.10.0
libtpu: 0.0.40
codegen_flags: <defaults>
</compile_context>

<pallas_src>
import functools
import math

import jax
import jax.numpy as jnp
from jax.experimental import pallas as pl
from jax.experimental.pallas import tpu as pltpu


_INV_SQRT2 = 1.0 / math.sqrt(2.0)


def _ffn_kernel(x_ref, w0_ref, b0_ref, w1_ref, b1_ref, o_ref, acc_ref):
    """One grid step = (M tile i, shard p, Fp tile f).

    x_ref  : (tm, H)   bf16 activation tile (resident across all (p, f))
    w0_ref : (H, tf)   bf16 column-parallel weight slice of shard p
    b0_ref : (1, tf)   f32 column-parallel bias slice of shard p
    w1_ref : (tf, H)   bf16 row-parallel weight slice of shard p
    b1_ref : (1, H)    f32 row-parallel bias (folded into accumulator init)
    o_ref  : (tm, H)   output tile (written once, on the last (p, f) step)
    acc_ref: (tm, H)   f32 VMEM accumulator (simulated all-reduce SUM)
    """
    p = pl.program_id(1)
    f = pl.program_id(2)

    # TODO(synk): b1 is added exactly once after the simulated all-reduce
    # (standard Megatron row-parallel convention); folded into the init so no
    # extra epilogue pass over the output tile is needed.
    @pl.when((p == 0) & (f == 0))
    def _():
        acc_ref[...] = jnp.broadcast_to(b1_ref[...], acc_ref.shape)

    # Column-parallel linear slice: bf16 operands, f32 accumulation on MXU.
    h = jnp.dot(x_ref[...], w0_ref[...], preferred_element_type=jnp.float32)
    h = h + b0_ref[...]

    # Exact GELU in f32 (matches torch nn.GELU() default: erf-based).
    g = 0.5 * h * (1.0 + jax.lax.erf(h * _INV_SQRT2))

    # Row-parallel linear slice; accumulate the partial sums (all-reduce SUM).
    acc_ref[...] += jnp.dot(g.astype(w1_ref.dtype), w1_ref[...],
                            preferred_element_type=jnp.float32)

    # Last reduction step for this M tile: emit the output exactly once.
    @pl.when((p == pl.num_programs(1) - 1) & (f == pl.num_programs(2) - 1))
    def _():
        o_ref[...] = acc_ref[...].astype(o_ref.dtype)


def _divisible_tile(total, preferred, align):
    """Largest multiple of `align` <= preferred that divides `total`, else total."""
    if total <= preferred:
        return total
    t = (preferred // align) * align
    while t >= align:
        if total % t == 0:
            return t
        t -= align
    return total


def _pick_tiles(M, Fp, H, out_itemsize, budget_bytes):
    """Pick (tm, tf): largest aligned divisors whose working set fits the budget."""

    def vmem(tm, tf):
        return (2 * tm * H * 2            # x tile, double-buffered (bf16)
                + 2 * H * tf * 2          # w0 tile (bf16)
                + 2 * tf * 4              # b0 tile (f32)
                + 2 * tf * H * 2          # w1 tile (bf16)
                + 2 * H * 4               # b1 (f32)
                + 2 * tm * H * out_itemsize   # output tile
                + tm * H * 4)             # f32 accumulator scratch

    best = None
    for cand_tm in (512, 256, 128, 64, 32, 16, 8):
        for cand_tf in (1024, 512, 256, 128):
            tm = _divisible_tile(M, cand_tm, 8)
            tf = _divisible_tile(Fp, cand_tf, 128)
            if vmem(tm, tf) <= budget_bytes:
                return tm, tf
            if best is None or vmem(tm, tf) < vmem(*best):
                best = (tm, tf)
    return best


@functools.partial(jax.jit, static_argnames=("num_parallel",))
def parallel_ffn(x, w0, b0, w1, b1, *, num_parallel):
    """x: (B, S, H); w0: (P, H, Fp); b0: (P, Fp); w1: (P, Fp, H); b1: (H,)."""
    B, S, H = x.shape
    P, _, Fp = w0.shape
    assert P == num_parallel
    M = B * S
    out_dtype = x.dtype
    out_itemsize = jnp.dtype(out_dtype).itemsize

    # VMEM-budget-aware tiles (double-buffered pipeline working set <= ~40 MiB).
    tm, tf = _pick_tiles(M, Fp, H, out_itemsize, budget_bytes=40 * 1024 * 1024)

    # bf16 matmul operands (higher MXU throughput, half the weight DMA bytes);
    # biases stay f32 and are applied on the f32 matmul outputs.
    x2 = x.reshape(M, H).astype(jnp.bfloat16)
    w0b = w0.astype(jnp.bfloat16)
    w1b = w1.astype(jnp.bfloat16)
    b0_3 = b0.reshape(P, 1, Fp).astype(jnp.float32)
    b1_2 = b1.reshape(1, H).astype(jnp.float32)

    grid = (M // tm, P, Fp // tf)

    out_bytes = M * H * out_itemsize
    cost = pl.CostEstimate(
        flops=4 * M * H * P * Fp,          # two matmuls per shard
        transcendentals=M * P * Fp,        # erf in the GELU
        bytes_accessed=(x2.size * 2 + w0b.size * 2 + w1b.size * 2
                        + b0_3.size * 4 + b1_2.size * 4 + out_bytes),
    )

    out2 = pl.pallas_call(
        _ffn_kernel,
        out_shape=jax.ShapeDtypeStruct((M, H), out_dtype),
        grid_spec=pltpu.PrefetchScalarGridSpec(
            num_scalar_prefetch=0,
            grid=grid,
            in_specs=[
                # Activations: same M tile for every (p, f) -> stays resident.
                pl.BlockSpec((tm, H), lambda i, p, f: (i, 0)),
                # W0 shard slice (shard dim squeezed -> clean 2-D MXU operand).
                pl.BlockSpec((pl.Squeezed(), H, tf), lambda i, p, f: (p, 0, f)),
                # b0 shard slice.
                pl.BlockSpec((pl.Squeezed(), 1, tf), lambda i, p, f: (p, 0, f)),
                # W1 shard slice.
                pl.BlockSpec((pl.Squeezed(), tf, H), lambda i, p, f: (p, f, 0)),
                # b1 (whole vector, constant block -> loaded once).
                pl.BlockSpec((1, H), lambda i, p, f: (0, 0)),
            ],
            # Output tile resident across the (p, f) reduction axes.
            out_specs=pl.BlockSpec((tm, H), lambda i, p, f: (i, 0)),
            scratch_shapes=[pltpu.VMEM((tm, H), jnp.float32)],
        ),
        compiler_params=pltpu.CompilerParams(
            # M axis is independent (megacore / dual-TC on v7x);
            # shard and Fp axes are sequential reductions.
            dimension_semantics=("parallel", "arbitrary", "arbitrary"),
            vmem_limit_bytes=48 * 1024 * 1024,
        ),
        cost_estimate=cost,
    )(x2, w0b, b0_3, w1b, b1_2)

    return out2.reshape(B, S, H)


def _reference(x, w0, b0, w1, b1):
    """Pure-JAX f32 reference of the tensor-parallel FFN + all-reduce(SUM)."""
    P = w0.shape[0]
    y = jnp.zeros(x.shape[:-1] + (w1.shape[-1],), jnp.float32)
    for p in range(P):
        h = x @ w0[p] + b0[p]
        g = 0.5 * h * (1.0 + jax.lax.erf(h / jnp.sqrt(2.0)))
        y = y + g @ w1[p]
    return y + b1


if __name__ == "__main__":
    # Small shapes consistent with the module's forward.
    batch, seq = 2, 8
    hidden_size = 32
    ff_hidden_size = 64
    num_parallel = 2
    ff_per_shard = ff_hidden_size // num_parallel

    key = jax.random.PRNGKey(0)
    kx, k0, kb0, k1, kb1 = jax.random.split(key, 5)

    x = jax.random.normal(kx, (batch, seq, hidden_size), dtype=jnp.float32)
    # layer_0: ParallelLinear1D_Col (hidden -> FF_hidden / num_parallel per shard)
    w0 = jax.random.normal(k0, (num_parallel, hidden_size, ff_per_shard),
                           dtype=jnp.float32) * 0.05
    b0 = jax.random.normal(kb0, (num_parallel, ff_per_shard),
                           dtype=jnp.float32) * 0.05
    # layer_1: ParallelLinear1D_Row (FF_hidden / num_parallel -> hidden per shard)
    w1 = jax.random.normal(k1, (num_parallel, ff_per_shard, hidden_size),
                           dtype=jnp.float32) * 0.05
    b1 = jax.random.normal(kb1, (hidden_size,), dtype=jnp.float32) * 0.05

    out = parallel_ffn(x, w0, b0, w1, b1, num_parallel=num_parallel)
    out = jax.block_until_ready(out)

    ref = _reference(x, w0, b0, w1, b1)
    assert out.shape == (batch, seq, hidden_size)
    # bf16 matmul operands with f32 accumulation: loosened tolerance vs f32 ref.
    assert jnp.allclose(out, ref, atol=1e-2, rtol=1e-2), "mismatch vs reference"

    # TODO(synk): torch.distributed barrier/all_reduce and the returned wall-clock
    # timings (mlp_comm_time, mlp_comp_time) have no Pallas equivalent; the
    # all-reduce SUM is simulated by the in-kernel shard-axis accumulation.
    print("KERNEL_OK")
</pallas_src>

<mosaic_0001>
module attributes {stable_mosaic.version = 11 : i64} {
  func.func @_ffn_kernel(%arg0: i32, %arg1: i32, %arg2: i32, %arg3: memref<16x32xbf16, #tpu.memory_space<vmem>>, %arg4: memref<1x32x32xbf16, #tpu.memory_space<vmem>>, %arg5: memref<1x1x32xf32, #tpu.memory_space<vmem>>, %arg6: memref<1x32x32xbf16, #tpu.memory_space<vmem>>, %arg7: memref<1x32xf32, #tpu.memory_space<vmem>>, %arg8: memref<16x32xf32, #tpu.memory_space<vmem>>, %arg9: memref<16x32xf32, #tpu.memory_space<vmem>>) attributes {dimension_semantics = [#tpu.dimension_semantics<parallel>, #tpu.dimension_semantics<arbitrary>, #tpu.dimension_semantics<arbitrary>], iteration_bounds = array<i64: 1, 2, 1>, scalar_prefetch = 0 : i64, scratch_operands = 1 : i64, tpu.core_type = #tpu.core_type<tc>, window_params = [{transform_indices = @transform_0, window_bounds = array<i64: 16, 32>}, {transform_indices = @transform_1, window_bounds = array<i64: 1, 32, 32>}, {transform_indices = @transform_2, window_bounds = array<i64: 1, 1, 32>}, {transform_indices = @transform_3, window_bounds = array<i64: 1, 32, 32>}, {pipeline_mode = #tpu.pipeline_mode<synchronous>, transform_indices = @transform_4, window_bounds = array<i64: 1, 32>}, {transform_indices = @transform_5, window_bounds = array<i64: 16, 32>}]} {
    %c0_i32 = arith.constant 0 : i32
    %0 = arith.cmpi eq, %arg1, %c0_i32 : i32
    %c0_i32_0 = arith.constant 0 : i32
    %1 = arith.cmpi eq, %arg2, %c0_i32_0 : i32
    %2 = arith.andi %0, %1 : i1
    %3 = arith.extui %2 : i1 to i32
    %c0_i32_1 = arith.constant 0 : i32
    %4 = arith.cmpi ne, %3, %c0_i32_1 : i32
    scf.if %4 {
      %c0_22 = arith.constant 0 : index
      %c0_23 = arith.constant 0 : index
      %33 = vector.load %arg7[%c0_22, %c0_23] : memref<1x32xf32, #tpu.memory_space<vmem>>, vector<1x32xf32>
      %34 = vector.shape_cast %33 : vector<1x32xf32> to vector<1x32xf32>
      %35 = vector.broadcast %34 : vector<1x32xf32> to vector<16x32xf32>
      %c0_24 = arith.constant 0 : index
      %c0_25 = arith.constant 0 : index
      %36 = vector.load %arg9[%c0_24, %c0_25] : memref<16x32xf32, #tpu.memory_space<vmem>>, vector<16x32xf32>
      tpu.vector_store %arg9[%c0_24, %c0_25], %35 {strides = array<i32>} : memref<16x32xf32, #tpu.memory_space<vmem>>, vector<16x32xf32>,
    } else {
    }
    %c0 = arith.constant 0 : index
    %c0_2 = arith.constant 0 : index
    %5 = vector.load %arg3[%c0, %c0_2] : memref<16x32xbf16, #tpu.memory_space<vmem>>, vector<16x32xbf16>
    %c0_3 = arith.constant 0 : index
    %c0_4 = arith.constant 0 : index
    %c0_5 = arith.constant 0 : index
    %6 = vector.load %arg4[%c0_3, %c0_4, %c0_5] : memref<1x32x32xbf16, #tpu.memory_space<vmem>>, vector<1x32x32xbf16>
    %7 = vector.shape_cast %6 : vector<1x32x32xbf16> to vector<32x32xbf16>
    %cst = arith.constant dense<0.000000e+00> : vector<16x32xf32>
    %8 = tpu.matmul %5, %7, %cst {dimension_numbers = #tpu.dot_dimension_numbers<[1], [0], [0], [1], [0, 0, 1, 1], [], []>} : vector<16x32xbf16>, vector<32x32xbf16>, vector<16x32xf32> -> vector<16x32xf32>
    %c0_6 = arith.constant 0 : index
    %c0_7 = arith.constant 0 : index
    %c0_8 = arith.constant 0 : index
    %9 = vector.load %arg5[%c0_6, %c0_7, %c0_8] : memref<1x1x32xf32, #tpu.memory_space<vmem>>, vector<1x1x32xf32>
    %10 = vector.shape_cast %9 : vector<1x1x32xf32> to vector<1x32xf32>
    %11 = vector.broadcast %10 : vector<1x32xf32> to vector<16x32xf32>
    %12 = arith.addf %8, %11 : vector<16x32xf32>
    %cst_9 = arith.constant 5.000000e-01 : f32
    %13 = vector.broadcast %cst_9 : f32 to vector<16x32xf32>
    %14 = arith.mulf %13, %12 : vector<16x32xf32>
    %cst_10 = arith.constant 0.707106769 : f32
    %15 = vector.broadcast %cst_10 : f32 to vector<16x32xf32>
    %16 = arith.mulf %12, %15 : vector<16x32xf32>
    %17 = math.erf %16 : vector<16x32xf32>
    %cst_11 = arith.constant 1.000000e+00 : f32
    %18 = vector.broadcast %cst_11 : f32 to vector<16x32xf32>
    %19 = arith.addf %18, %17 : vector<16x32xf32>
    %20 = arith.mulf %14, %19 : vector<16x32xf32>
    %c0_12 = arith.constant 0 : index
    %c0_13 = arith.constant 0 : index
    %21 = vector.load %arg9[%c0_12, %c0_13] : memref<16x32xf32, #tpu.memory_space<vmem>>, vector<16x32xf32>
    %22 = arith.truncf %20 : vector<16x32xf32> to vector<16x32xbf16>
    %c0_14 = arith.constant 0 : index
    %c0_15 = arith.constant 0 : index
    %c0_16 = arith.constant 0 : index
    %23 = vector.load %arg6[%c0_14, %c0_15, %c0_16] : memref<1x32x32xbf16, #tpu.memory_space<vmem>>, vector<1x32x32xbf16>
    %24 = vector.shape_cast %23 : vector<1x32x32xbf16> to vector<32x32xbf16>
    %cst_17 = arith.constant dense<0.000000e+00> : vector<16x32xf32>
    %25 = tpu.matmul %22, %24, %cst_17 {dimension_numbers = #tpu.dot_dimension_numbers<[1], [0], [0], [1], [0, 0, 1, 1], [], []>} : vector<16x32xbf16>, vector<32x32xbf16>, vector<16x32xf32> -> vector<16x32xf32>
    %26 = arith.addf %21, %25 : vector<16x32xf32>
    %c0_18 = arith.constant 0 : index
    %c0_19 = arith.constant 0 : index
    %27 = vector.load %arg9[%c0_18, %c0_19] : memref<16x32xf32, #tpu.memory_space<vmem>>, vector<16x32xf32>
    tpu.vector_store %arg9[%c0_18, %c0_19], %26 {strides = array<i32>} : memref<16x32xf32, #tpu.memory_space<vmem>>, vector<16x32xf32>,
    %c1_i32 = arith.constant 1 : i32
    %28 = arith.cmpi eq, %arg1, %c1_i32 : i32
    %c0_i32_20 = arith.constant 0 : i32
    %29 = arith.cmpi eq, %arg2, %c0_i32_20 : i32
    %30 = arith.andi %28, %29 : i1
    %31 = arith.extui %30 : i1 to i32
    %c0_i32_21 = arith.constant 0 : i32
    %32 = arith.cmpi ne, %31, %c0_i32_21 : i32
    scf.if %32 {
      %c0_22 = arith.constant 0 : index
      %c0_23 = arith.constant 0 : index
      %33 = vector.load %arg9[%c0_22, %c0_23] : memref<16x32xf32, #tpu.memory_space<vmem>>, vector<16x32xf32>
      %c0_24 = arith.constant 0 : index
      %c0_25 = arith.constant 0 : index
      %34 = vector.load %arg8[%c0_24, %c0_25] : memref<16x32xf32, #tpu.memory_space<vmem>>, vector<16x32xf32>
      tpu.vector_store %arg8[%c0_24, %c0_25], %33 {strides = array<i32>} : memref<16x32xf32, #tpu.memory_space<vmem>>, vector<16x32xf32>,
    } else {
    }
    return
  }
  func.func @transform_0(%arg0: i32, %arg1: i32, %arg2: i32) -> (i32, i32) {
    %c0_i32 = arith.constant 0 : i32
    %c0_i32_0 = arith.constant 0 : i32
    return %arg0, %c0_i32 : i32, i32
  }
  func.func @transform_1(%arg0: i32, %arg1: i32, %arg2: i32) -> (i32, i32, i32) {
    %c0_i32 = arith.constant 0 : i32
    %c0_i32_0 = arith.constant 0 : i32
    return %arg1, %c0_i32, %arg2 : i32, i32, i32
  }
  func.func @transform_2(%arg0: i32, %arg1: i32, %arg2: i32) -> (i32, i32, i32) {
    %c0_i32 = arith.constant 0 : i32
    %c0_i32_0 = arith.constant 0 : i32
    return %arg1, %c0_i32, %arg2 : i32, i32, i32
  }
  func.func @transform_3(%arg0: i32, %arg1: i32, %arg2: i32) -> (i32, i32, i32) {
    %c0_i32 = arith.constant 0 : i32
    %c0_i32_0 = arith.constant 0 : i32
    return %arg1, %arg2, %c0_i32 : i32, i32, i32
  }
  func.func @transform_4(%arg0: i32, %arg1: i32, %arg2: i32) -> (i32, i32) {
    %c0_i32 = arith.constant 0 : i32
    %c0_i32_0 = arith.constant 0 : i32
    %c0_i32_1 = arith.constant 0 : i32
    return %c0_i32, %c0_i32_0 : i32, i32
  }
  func.func @transform_5(%arg0: i32, %arg1: i32, %arg2: i32) -> (i32, i32) {
    %c0_i32 = arith.constant 0 : i32
    %c0_i32_0 = arith.constant 0 : i32
    return %arg0, %c0_i32 : i32, i32
  }
}

</mosaic_0001>

<llo_original>
// kernel: parallel_ffn.1
$region0: #{parallel_ffn.1}
  #allocation0 [shape = 'u32[]', space=smem, size = 0x4, offset = 0x4, fixed_abs, tag = 'smem constant byte address 0x4 - core index']
  #allocation1 [shape = 'u32[144,128]{1,0:T(1,128)}', space=vmem, size = 0x12000, scoped, tag = 'internal scratch']
  #allocation2 [shape = 'f32[16,32]{1,0:T(8,128)}', space=vmem, size = 0x2000, scoped, tag = 'scratch operand']
  %s0 = inlined_call_operand.vmem [shape: bf16[16,32], index: 0, kind: input, shape index: {}]
  %s1 = inlined_call_operand.vmem [shape: bf16[2,32,32], index: 1, kind: input, shape index: {}]
  %s2 = inlined_call_operand.vmem [shape: f32[2,1,32], index: 2, kind: input, shape index: {}]
  %s3 = inlined_call_operand.vmem [shape: bf16[2,32,32], index: 3, kind: input, shape index: {}]
  %s4 = inlined_call_operand.vmem [shape: f32[1,32], index: 4, kind: input, shape index: {}]
  %s5 = inlined_call_operand.hbm [shape: f32[16,32], index: 5, kind: output, shape index: {}]
  %s6 = sld [smem:[#allocation0]]
  $region61: #{parallel_ffn.1} parent=0
    _
  %s8 = ssub.s32 1, %s6
  %s9 = scalar_select 0, %s8, %s6
  $region1: #{parallel_ffn.1} parent=0
    #allocation3 [shape = 'u8[8192]{0}', space=vmem, size = 0x2000, scoped, tag = 'output window, operand 0, single buffered']
    #allocation4 [shape = 's32[2]{0}', space=sflag, size = 0x8, scoped, tag = 'scoped memory for parallel_ffn.1']
    %10 = vsyncpa [#allocation4], 0
    loop: start=0, step=1, limit=4
    $region2: #{parallel_ffn.1} parent=1 // loop_pre_header
      _
    $region3: #{parallel_ffn.1} parent=1 // loop_header
      %s12 = sphi 0, %s16
      %p13 = scmp.ge.s32.totalorder %s12, 4
      %s19 = sphi 0, %s38
      %s20 = sphi 0, %s34
      %s21 = sphi 0, %s30
      %s22 = sphi 0, %s19
      %s23 = sphi 0, %s20
      %s24 = sphi 0, %s21
      %s25 = sphi 0, %s22
      %s26 = sphi 0, %s23
      %s27 = sphi 0, %s24
      %s41 = sphi 0, %s43
      %s44 = sphi 0, %s41
      %s45 = sphi 0, %s44
      %s61 = sphi 0, %s45
      %s69 = sphi 0, %s71
      %s72 = sphi 0, %s69
      %s73 = sphi 0, %s72
      %s89 = sphi 0, %s73
      %s97 = sphi 0, %s99
      %s100 = sphi 0, %s97
      %s101 = sphi 0, %s100
      %s117 = sphi 0, %s101
      %s125 = sphi 0, %s127
      %s128 = sphi 0, %s125
      %s129 = sphi 0, %s128
      %s145 = sphi 0, %s129
      %s149 = sphi 0, %s149
      %s151 = sphi 0, %s149
      %s152 = sphi 0, %s151
      %s166 = sphi 0, %s152
      %s172 = sphi 0, %s174
      %s175 = sphi 0, %s172
      %s176 = sphi 0, %s175
      %s192 = sphi 0, %s176
    $region4: #{parallel_ffn.1} parent=1 // loop_header_branch
      %15 = sbr.rel (%p13) target = $region8
    $region5: #{parallel_ffn.1} parent=1 // loop_body
      %s17 = ssub.s32 %s12, 1
      %s18 = ssub.s32 %s12, 2
      %s28 = sadd.s32 1, %s21
      %p29 = scmp.ge.s32.totalorder %s28, 1
      %s30 = scalar_select %p29, 0, %s28
      %s31 = sadd.s32 1, %s20
      %s32 = scalar_select %p29, %s31, %s20
      %p33 = scmp.ge.s32.totalorder %s32, 2
      %s34 = scalar_select %p33, 0, %s32
      %s35 = sadd.s32 1, %s19
      %s36 = scalar_select %p33, %s35, %s19
      %p37 = scmp.ge.s32.totalorder %s36, 1
      %s38 = scalar_select %p37, 0, %s36
      %s39 = ssub.s32 %s19, %s38
      %p40 = scmp.eq.s32.totalorder %s39, 0
      %s42 = sadd.s32 %s41, 1
      %s43 = scalar_select %p40, %s41, %s42
      %p46 = pneg %p40
      %p47 = scmp.eq.s32.totalorder %s12, 1
      %p48 = por %p46, %p47
      %p49 = scmp.ne.s32.totalorder %s41, %s44
      %p50 = scmp.eq.s32.totalorder %s12, 0
      %p51 = por %p49, %p50
      %p52 = scmp.ne.s32.totalorder %s41, %s44
      %p53 = scmp.eq.s32.totalorder %s17, 1
      %p54 = por %p52, %p53
      %p55 = scmp.ne.s32.totalorder %s44, %s45
      %p56 = scmp.eq.s32.totalorder %s17, 0
      %p57 = por %p55, %p56
      %p58 = scmp.ne.s32.totalorder %s44, %s45
      %p59 = scmp.eq.s32.totalorder %s18, 1
      %p60 = por %p58, %p59
      %p62 = scmp.ne.s32.totalorder %s45, %s61
      %p63 = scmp.eq.s32.totalorder %s18, 0
      %p64 = por %p62, %p63
      %s65 = ssub.s32 %s20, %s34
      %s66 = ssub.s32 %s21, %s30
      %s67 = sor.u32 %s65, %s66
      %p68 = scmp.eq.s32.totalorder %s67, 0
      %s70 = sadd.s32 %s69, 1
      %s71 = scalar_select %p68, %s69, %s70
      %p74 = pneg %p68
      %p75 = scmp.eq.s32.totalorder %s12, 1
      %p76 = por %p74, %p75
      %p77 = scmp.ne.s32.totalorder %s69, %s72
      %p78 = scmp.eq.s32.totalorder %s12, 0
      %p79 = por %p77, %p78
      %p80 = scmp.ne.s32.totalorder %s69, %s72
      %p81 = scmp.eq.s32.totalorder %s17, 1
      %p82 = por %p80, %p81
      %p83 = scmp.ne.s32.totalorder %s72, %s73
      %p84 = scmp.eq.s32.totalorder %s17, 0
      %p85 = por %p83, %p84
      %p86 = scmp.ne.s32.totalorder %s72, %s73
      %p87 = scmp.eq.s32.totalorder %s18, 1
      %p88 = por %p86, %p87
      %p90 = scmp.ne.s32.totalorder %s73, %s89
      %p91 = scmp.eq.s32.totalorder %s18, 0
      %p92 = por %p90, %p91
      %s93 = ssub.s32 %s20, %s34
      %s94 = ssub.s32 %s21, %s30
      %s95 = sor.u32 %s93, %s94
      %p96 = scmp.eq.s32.totalorder %s95, 0
      %s98 = sadd.s32 %s97, 1
      %s99 = scalar_select %p96, %s97, %s98
      %p102 = pneg %p96
      %p103 = scmp.eq.s32.totalorder %s12, 1
      %p104 = por %p102, %p103
      %p105 = scmp.ne.s32.totalorder %s97, %s100
      %p106 = scmp.eq.s32.totalorder %s12, 0
      %p107 = por %p105, %p106
      %p108 = scmp.ne.s32.totalorder %s97, %s100
      %p109 = scmp.eq.s32.totalorder %s17, 1
      %p110 = por %p108, %p109
      %p111 = scmp.ne.s32.totalorder %s100, %s101
      %p112 = scmp.eq.s32.totalorder %s17, 0
      %p113 = por %p111, %p112
      %p114 = scmp.ne.s32.totalorder %s100, %s101
      %p115 = scmp.eq.s32.totalorder %s18, 1
      %p116 = por %p114, %p115
      %p118 = scmp.ne.s32.totalorder %s101, %s117
      %p119 = scmp.eq.s32.totalorder %s18, 0
      %p120 = por %p118, %p119
      %s121 = ssub.s32 %s20, %s34
      %s122 = ssub.s32 %s21, %s30
      %s123 = sor.u32 %s121, %s122
      %p124 = scmp.eq.s32.totalorder %s123, 0
      %s126 = sadd.s32 %s125, 1
      %s127 = scalar_select %p124, %s125, %s126
      %p130 = pneg %p124
      %p131 = scmp.eq.s32.totalorder %s12, 1
      %p132 = por %p130, %p131
      %p133 = scmp.ne.s32.totalorder %s125, %s128
      %p134 = scmp.eq.s32.totalorder %s12, 0
      %p135 = por %p133, %p134
      %p136 = scmp.ne.s32.totalorder %s125, %s128
      %p137 = scmp.eq.s32.totalorder %s17, 1
      %p138 = por %p136, %p137
      %p139 = scmp.ne.s32.totalorder %s128, %s129
      %p140 = scmp.eq.s32.totalorder %s17, 0
      %p141 = por %p139, %p140
      %p142 = scmp.ne.s32.totalorder %s128, %s129
      %p143 = scmp.eq.s32.totalorder %s18, 1
      %p144 = por %p142, %p143
      %p146 = scmp.ne.s32.totalorder %s129, %s145
      %p147 = scmp.eq.s32.totalorder %s18, 0
      %p148 = por %p146, %p147
      %s150 = sadd.s32 %s149, 1
      %p153 = scmp.eq.s32.totalorder %s12, 1
      %p154 = scmp.ne.s32.totalorder %s149, %s151
      %p155 = scmp.eq.s32.totalorder %s12, 0
      %p156 = por %p154, %p155
      %p157 = scmp.ne.s32.totalorder %s149, %s151
      %p158 = scmp.eq.s32.totalorder %s17, 1
      %p159 = por %p157, %p158
      %p160 = scmp.ne.s32.totalorder %s151, %s152
      %p161 = scmp.eq.s32.totalorder %s17, 0
      %p162 = por %p160, %p161
      %p163 = scmp.ne.s32.totalorder %s151, %s152
      %p164 = scmp.eq.s32.totalorder %s18, 1
      %p165 = por %p163, %p164
      %p167 = scmp.ne.s32.totalorder %s152, %s166
      %p168 = scmp.eq.s32.totalorder %s18, 0
      %p169 = por %p167, %p168
      %s170 = ssub.s32 %s19, %s38
      %p171 = scmp.eq.s32.totalorder %s170, 0
      %s173 = sadd.s32 %s172, 1
      %s174 = scalar_select %p171, %s172, %s173
      %p177 = pneg %p171
      %p178 = scmp.eq.s32.totalorder %s12, 1
      %p179 = por %p177, %p178
      %p180 = scmp.ne.s32.totalorder %s172, %s175
      %p181 = scmp.eq.s32.totalorder %s12, 0
      %p182 = por %p180, %p181
      %p183 = scmp.ne.s32.totalorder %s172, %s175
      %p184 = scmp.eq.s32.totalorder %s17, 1
      %p185 = por %p183, %p184
      %p186 = scmp.ne.s32.totalorder %s175, %s176
      %p187 = scmp.eq.s32.totalorder %s17, 0
      %p188 = por %p186, %p187
      %p189 = scmp.ne.s32.totalorder %s175, %s176
      %p190 = scmp.eq.s32.totalorder %s18, 1
      %p191 = por %p189, %p190
      %p193 = scmp.ne.s32.totalorder %s176, %s192
      %p194 = scmp.eq.s32.totalorder %s18, 0
      %p195 = por %p193, %p194
      %p196 = scmp.le.s32.totalorder 1, %s12
      %p197 = scmp.lt.s32.totalorder %s12, 3
      %p198 = pnand %p196, %p197
      %p199 = pneg %p198
      // Predicated region
      $region9: #{parallel_ffn.1} parent=5 // pred_check
        _
      $region10: #{parallel_ffn.1} parent=5 // pred_check_branch
        %201 = sbr.rel (%p198) target = $region12
      $region11: #{parallel_ffn.1} parent=5 // pred_region
        %s202 = ssub.s32 %s12, 1
        // Predicated region
        $region13: #{parallel_ffn.1} parent=11 // pred_check
          %p203 = pneg %p57
        $region14: #{parallel_ffn.1} parent=11 // pred_check_branch
          %205 = sbr.rel (%p203) target = $region16
        $region15: #{parallel_ffn.1} parent=11 // pred_region
          %s206 = smul.u32 2, %s22
          %p207 = scmp.lt.s32.totalorder %s206, 1
          %s208 = scalar_select %p207, %s206, 1
          %s209 = smul.addr %s208, 4
          %s210 = scalar_lea.vmem %s0, %s209
          %s211 = smul.u32 2, %s22
        $region16: #{parallel_ffn.1} parent=11 // pred_fallthru
          _
        // Predicated region
        $region17: #{parallel_ffn.1} parent=11 // pred_check
          %p212 = pneg %p162
        $region18: #{parallel_ffn.1} parent=11 // pred_check_branch
          %214 = sbr.rel (%p212) target = $region20
        $region19: #{parallel_ffn.1} parent=11 // pred_region
          _
        $region20: #{parallel_ffn.1} parent=11 // pred_fallthru
          _
      $region12: #{parallel_ffn.1} parent=5 // pred_fallthru
        _
      %p215 = scmp.lt.s32.totalorder %s12, 2
      // Predicated region
      $region21: #{parallel_ffn.1} parent=5 // pred_check
        %p216 = pneg %p215
      $region22: #{parallel_ffn.1} parent=5 // pred_check_branch
        %218 = sbr.rel (%p216) target = $region24
      $region23: #{parallel_ffn.1} parent=5 // pred_region
        // Predicated region
        $region25: #{parallel_ffn.1} parent=23 // pred_check
          %p219 = pneg %p79
        $region26: #{parallel_ffn.1} parent=23 // pred_check_branch
          %221 = sbr.rel (%p219) target = $region28
        $region27: #{parallel_ffn.1} parent=23 // pred_region
          %p222 = scmp.lt.s32.totalorder %s20, 1
          %s223 = scalar_select %p222, %s20, 1
          %p224 = scmp.lt.s32.totalorder %s21, 0
          %s225 = scalar_select %p224, %s21, 0
          %s226 = smul.addr %s223, 4
          %s227 = sadd.s32 %s225, %s226
          %s228 = smul.addr %s227, 4
          %s229 = scalar_lea.vmem %s1, %s228
        $region28: #{parallel_ffn.1} parent=23 // pred_fallthru
          _
        // Predicated region
        $region29: #{parallel_ffn.1} parent=23 // pred_check
          %p230 = pneg %p107
        $region30: #{parallel_ffn.1} parent=23 // pred_check_branch
          %232 = sbr.rel (%p230) target = $region32
        $region31: #{parallel_ffn.1} parent=23 // pred_region
          %p233 = scmp.lt.s32.totalorder %s20, 1
          %s234 = scalar_select %p233, %s20, 1
          %p235 = scmp.lt.s32.totalorder %s21, 0
          %s236 = scalar_select %p235, %s21, 0
          %s237 = sadd.s32 %s236, %s234
          %s238 = scalar_lea.vmem %s2, %s237
        $region32: #{parallel_ffn.1} parent=23 // pred_fallthru
          _
        // Predicated region
        $region33: #{parallel_ffn.1} parent=23 // pred_check
          %p239 = pneg %p135
        $region34: #{parallel_ffn.1} parent=23 // pred_check_branch
          %241 = sbr.rel (%p239) target = $region36
        $region35: #{parallel_ffn.1} parent=23 // pred_region
          %s242 = smul.u32 4, %s21
          %p243 = scmp.lt.s32.totalorder %s20, 1
          %s244 = scalar_select %p243, %s20, 1
          %p245 = scmp.lt.s32.totalorder %s242, 3
          %s246 = scalar_select %p245, %s242, 3
          %s247 = smul.addr %s244, 4
          %s248 = sadd.s32 %s246, %s247
          %s249 = smul.addr %s248, 4
          %s250 = scalar_lea.vmem %s3, %s249
          %s251 = smul.u32 4, %s21
        $region36: #{parallel_ffn.1} parent=23 // pred_fallthru
          _
      $region24: #{parallel_ffn.1} parent=5 // pred_fallthru
        _
      %p252 = scmp.le.s32.totalorder 1, %s12
      %p253 = scmp.lt.s32.totalorder %s12, 3
      %p254 = pnand %p252, %p253
      %p255 = pneg %p254
      // Predicated region
      $region37: #{parallel_ffn.1} parent=5 // pred_check
        _
      $region38: #{parallel_ffn.1} parent=5 // pred_check_branch
        %257 = sbr.rel (%p254) target = $region40
      $region39: #{parallel_ffn.1} parent=5 // pred_region
        %s258 = ssub.s32 %s12, 1
        %s259 = smul.u32 2, %s22
        %p260 = scmp.lt.s32.totalorder %s259, 1
        %s261 = scalar_select %p260, %s259, 1
        %s262 = smul.addr %s261, 4
        %s263 = scalar_lea.vmem %s0, %s262
        %p264 = pneg %p57
        %p265 = pneg %p54
        %p266 = scmp.lt.s32.totalorder %s23, 1
        %s267 = scalar_select %p266, %s23, 1
        %p268 = scmp.lt.s32.totalorder %s24, 0
        %s269 = scalar_select %p268, %s24, 0
        %s270 = smul.addr %s267, 4
        %s271 = sadd.s32 %s269, %s270
        %s272 = smul.addr %s271, 4
        %s273 = scalar_lea.vmem %s1, %s272
        %p274 = pneg %p85
        %p275 = pneg %p82
        %p276 = scmp.lt.s32.totalorder %s23, 1
        %s277 = scalar_select %p276, %s23, 1
        %p278 = scmp.lt.s32.totalorder %s24, 0
        %s279 = scalar_select %p278, %s24, 0
        %s280 = sadd.s32 %s279, %s277
        %s281 = scalar_lea.vmem %s2, %s280
        %p282 = pneg %p113
        %p283 = pneg %p110
        %s284 = smul.u32 4, %s24
        %p285 = scmp.lt.s32.totalorder %s23, 1
        %s286 = scalar_select %p285, %s23, 1
        %p287 = scmp.lt.s32.totalorder %s284, 3
        %s288 = scalar_select %p287, %s284, 3
        %s289 = smul.addr %s286, 4
        %s290 = sadd.s32 %s288, %s289
        %s291 = smul.addr %s290, 4
        %s292 = scalar_lea.vmem %s3, %s291
        %p293 = pneg %p141
        %p294 = pneg %p138
        %p295 = pneg %p162
        %p296 = pneg %p159
        %p297 = pneg %p188
        %p298 = pneg %p185
        %s299 = smul.u32 2, %s22
        %p300 = scmp.lt.s32.totalorder %s299, 1
        %s301 = scalar_select %p300, %s299, 1
        %s302 = smul.addr %s301, 4
        %s303 = scalar_lea.vmem %s0, %s302
        %s304 = smul.u32 2, %s22
        %p305 = scmp.lt.s32.totalorder %s23, 1
        %s306 = scalar_select %p305, %s23, 1
        %p307 = scmp.lt.s32.totalorder %s24, 0
        %s308 = scalar_select %p307, %s24, 0
        %s309 = smul.addr %s306, 4
        %s310 = sadd.s32 %s308, %s309
        %s311 = smul.addr %s310, 4
        %s312 = scalar_lea.vmem %s1, %s311
        %p313 = scmp.lt.s32.totalorder %s23, 1
        %s314 = scalar_select %p313, %s23, 1
        %p315 = scmp.lt.s32.totalorder %s24, 0
        %s316 = scalar_select %p315, %s24, 0
        %s317 = sadd.s32 %s316, %s314
        %s318 = scalar_lea.vmem %s2, %s317
        %s319 = smul.u32 4, %s24
        %p320 = scmp.lt.s32.totalorder %s23, 1
        %s321 = scalar_select %p320, %s23, 1
        %p322 = scmp.lt.s32.totalorder %s319, 3
        %s323 = scalar_select %p322, %s319, 3
        %s324 = smul.addr %s321, 4
        %s325 = sadd.s32 %s323, %s324
        %s326 = smul.addr %s325, 4
        %s327 = scalar_lea.vmem %s3, %s326
        %s328 = smul.u32 4, %s24
        %s329 = smul.u32 2, %s22
        %p331 = scmp.eq.s32.totalorder %s23, 0
        %p332 = scmp.eq.s32.totalorder %s24, 0
        %p333 = pnand %p331, %p332
        %p334 = pneg %p333
        // Predicated region
        $region41: #{parallel_ffn.1} parent=39 // pred_check
          _
        $region42: #{parallel_ffn.1} parent=39 // pred_check_branch
          %336 = sbr.rel (%p333) target = $region44
        $region43: #{parallel_ffn.1} parent=39 // pred_region
          %v337 = vld [vmem:[%s4] sm:$0x1]
          %v339 = vlaneseq
          %v340 = vshrl.u32 %v339, 7
          %v341 = vsub.s32 0, %v340
          %v342 = vrot.slane %v337, %v341
          %vm344 = vcmask 261120
          %345 = vst.msk [vmem:[#allocation2] sm:$0xff] %vm344, %v342
          %346 = vst.msk [vmem:[#allocation2 + $0x8] sm:$0xff] %vm344, %v342
        $region44: #{parallel_ffn.1} parent=39 // pred_fallthru
          _
        %v347 = vld [vmem:[%s303] sm:$0xf]
        %v348 = vld [vmem:[%s303 + $0x4] sm:$0xf]
        %v349 = vld [vmem:[%s312] sm:$0xf]
        %v350 = vld [vmem:[%s312 + $0x4] sm:$0xf]
        %v351 = vld [vmem:[%s312 + $0x8] sm:$0xf]
        %v352 = vld [vmem:[%s312 + $0xc] sm:$0xf]
        %v353 = vld [vmem:[%s318] sm:$0x1]
        %v355 = vlaneseq
        %v356 = vshrl.u32 %v355, 7
        %v357 = vsub.s32 0, %v356
        %v358 = vrot.slane %v353, %v357
        %v362 = vunpack.c.l.b16 %v347
        %v363 = vunpack.c.l.b16 %v348
        %v364 = vpack.c.b16 %v363, %v362
        %v369 = vunpack.c.l.b16 %v349
        %v370 = vunpack.c.l.b16 %v350
        %v371 = vunpack.c.l.b16 %v351
        %v372 = vunpack.c.l.b16 %v352
        %v373 = vpack.c.b16 %v370, %v369
        %v374 = vpack.c.b16 %v372, %v371
        %vm377 = vcmask 261120
        %v379 = vsel %vm377, %v364, 0
        %381 = vmatprep.subr.bf16.mxu0 0
        %382 = vmatpush1.bf16.msra.mxu0 %v373
        %383 = vmatprep.subr.bf16.mxu0 0
        %384 = vmatpush1.bf16.msra.mxu0 %v374
        %385 = vmatprep.subr.bf16.mxu0 0
        %386 = vmatpush1.bf16.msra.mxu0 0
        %387 = vmatprep.subr.bf16.mxu0 0
        %388 = vmatpush1.bf16.msra.mxu0 0
        %389 = vmatprep.subr.bf16.mxu0 0
        %390 = vmatpush1.bf16.msra.mxu0 0
        %391 = vmatprep.subr.bf16.mxu0 0
        %392 = vmatpush1.bf16.msra.mxu0 0
        %393 = vmatprep.subr.bf16.mxu0 0
        %394 = vmatpush1.bf16.msra.mxu0 0
        %395 = vmatprep.subr.bf16.mxu0 0
        %396 = vmatpush1.bf16.msra.mxu0 0
        %397 = vmatprep.subr.bf16.mxu0 0
        %398 = vmatpush1.bf16.msra.mxu0 0
        %399 = vmatprep.subr.bf16.mxu0 0
        %400 = vmatpush1.bf16.msra.mxu0 0
        %401 = vmatprep.subr.bf16.mxu0 0
        %402 = vmatpush1.bf16.msra.mxu0 0
        %403 = vmatprep.subr.bf16.mxu0 0
        %404 = vmatpush1.bf16.msra.mxu0 0
        %405 = vmatprep.subr.bf16.mxu0 0
        %406 = vmatpush1.bf16.msra.mxu0 0
        %407 = vmatprep.subr.bf16.mxu0 0
        %408 = vmatpush1.bf16.msra.mxu0 0
        %409 = vmatprep.subr.bf16.mxu0 0
        %410 = vmatpush1.bf16.msra.mxu0 0
        %411 = vmatprep.subr.bf16.mxu0 0
        %412 = vmatpush1.bf16.msra.mxu0 0
        %413 = vmatprep.mubr.bf16.mxu0 0
        %414 = vmatmul.mubr.bf16.gmra.mrb[0].mxu0 %v379
        %v415 = vpop.f32.mrb[0].mxu0
        %v416 = vadd.f32 %v358, %v415
        %v417 = vpop.f32.mrb[0].mxu0
        %v418 = vpop.f32.mrb[0].mxu0
        %v419 = vadd.f32 %v358, %v418
        %v420 = vpop.f32.mrb[0].mxu0
        %421 = vdwg.mxu0
        %v422 = vmul.f32 %v416, 0.5
        %v423 = vmul.f32 %v419, 0.5
        %v424 = vmul.f32 %v416, 0.70710677
        %v425 = vmul.f32 %v419, 0.70710677
        %v426 = verf.f32.pop %v424
        %v427 = verf.f32.pop %v425
        %v428 = vadd.f32 %v426, 1.0
        %v429 = vadd.f32 %v427, 1.0
        %v430 = vmul.f32 %v422, %v428
        %v431 = vmul.f32 %v423, %v429
        %v432 = vld [vmem:[#allocation2] sm:$0xff]
        %v433 = vld [vmem:[#allocation2 + $0x8] sm:$0xff]
        %v434 = vpack.c.bf16 %v431, %v430
        %v435 = vld [vmem:[%s327] sm:$0xf]
        %v436 = vld [vmem:[%s327 + $0x4] sm:$0xf]
        %v437 = vld [vmem:[%s327 + $0x8] sm:$0xf]
        %v438 = vld [vmem:[%s327 + $0xc] sm:$0xf]
        %v443 = vunpack.c.l.b16 %v435
        %v444 = vunpack.c.l.b16 %v436
        %v445 = vunpack.c.l.b16 %v437
        %v446 = vunpack.c.l.b16 %v438
        %v447 = vpack.c.b16 %v444, %v443
        %v448 = vpack.c.b16 %v446, %v445
        %v452 = vsel %vm377, %v434, 0
        %454 = vmatprep.subr.bf16.mxu0 0
        %455 = vmatpush1.bf16.msra.mxu0 %v447
        %456 = vmatprep.subr.bf16.mxu0 0
        %457 = vmatpush1.bf16.msra.mxu0 %v448
        %458 = vmatprep.subr.bf16.mxu0 0
        %459 = vmatpush1.bf16.msra.mxu0 0
        %460 = vmatprep.subr.bf16.mxu0 0
        %461 = vmatpush1.bf16.msra.mxu0 0
        %462 = vmatprep.subr.bf16.mxu0 0
        %463 = vmatpush1.bf16.msra.mxu0 0
        %464 = vmatprep.subr.bf16.mxu0 0
        %465 = vmatpush1.bf16.msra.mxu0 0
        %466 = vmatprep.subr.bf16.mxu0 0
        %467 = vmatpush1.bf16.msra.mxu0 0
        %468 = vmatprep.subr.bf16.mxu0 0
        %469 = vmatpush1.bf16.msra.mxu0 0
        %470 = vmatprep.subr.bf16.mxu0 0
        %471 = vmatpush1.bf16.msra.mxu0 0
        %472 = vmatprep.subr.bf16.mxu0 0
        %473 = vmatpush1.bf16.msra.mxu0 0
        %474 = vmatprep.subr.bf16.mxu0 0
        %475 = vmatpush1.bf16.msra.mxu0 0
        %476 = vmatprep.subr.bf16.mxu0 0
        %477 = vmatpush1.bf16.msra.mxu0 0
        %478 = vmatprep.subr.bf16.mxu0 0
        %479 = vmatpush1.bf16.msra.mxu0 0
        %480 = vmatprep.subr.bf16.mxu0 0
        %481 = vmatpush1.bf16.msra.mxu0 0
        %482 = vmatprep.subr.bf16.mxu0 0
        %483 = vmatpush1.bf16.msra.mxu0 0
        %484 = vmatprep.subr.bf16.mxu0 0
        %485 = vmatpush1.bf16.msra.mxu0 0
        %486 = vmatprep.mubr.bf16.mxu0 0
        %487 = vmatmul.mubr.bf16.gmra.mrb[0].mxu0 %v452
        %v488 = vpop.f32.mrb[0].mxu0
        %v489 = vadd.f32 0.0, %v488
        %v490 = vpop.f32.mrb[0].mxu0
        %v491 = vpop.f32.mrb[0].mxu0
        %v492 = vadd.f32 0.0, %v491
        %v493 = vpop.f32.mrb[0].mxu0
        %494 = vdwg.mxu0
        %v495 = vadd.f32 %v432, %v489
        %v496 = vadd.f32 %v433, %v492
        %497 = vst.msk [vmem:[#allocation2] sm:$0xff] %vm377, %v495
        %498 = vst.msk [vmem:[#allocation2 + $0x8] sm:$0xff] %vm377, %v496
        %p499 = scmp.eq.s32.totalorder %s23, 1
        %p500 = pnand %p499, %p332
        %p501 = pneg %p500
        // Predicated region
        $region45: #{parallel_ffn.1} parent=39 // pred_check
          _
        $region46: #{parallel_ffn.1} parent=39 // pred_check_branch
          %503 = sbr.rel (%p500) target = $region48
        $region47: #{parallel_ffn.1} parent=39 // pred_region
          %v504 = vld [vmem:[#allocation2] sm:$0xff]
          %v505 = vld [vmem:[#allocation2 + $0x8] sm:$0xff]
          %506 = vst.msk [vmem:[#allocation3] sm:$0xff] %vm377, %v504
          %507 = vst.msk [vmem:[#allocation3 + $0x8] sm:$0xff] %vm377, %v505
        $region48: #{parallel_ffn.1} parent=39 // pred_fallthru
          _
        // Predicated region
        $region49: #{parallel_ffn.1} parent=39 // pred_check
          %p508 = pneg %p185
        $region50: #{parallel_ffn.1} parent=39 // pred_check_branch
          %510 = sbr.rel (%p508) target = $region52
        $region51: #{parallel_ffn.1} parent=39 // pred_region
          %s511 = smul.u32 2, %s22
          %s513 = ssub.s32 256, 256
          %514 = vsyncadd [#allocation4], %s513
          %s515 = smul.addr %s511, 128
          %s516 = scalar_lea.hbm %s5, %s515
          %s517 = sshll.u32 [#allocation3], 4
          %s518 = int_to_ptr.vmem [resolvable:$true] %s517
          %523 = dma.vmem_to_hbm [thread:$0]  %s518, 256, %s516, [#allocation4], 128, 128, 8
        $region52: #{parallel_ffn.1} parent=39 // pred_fallthru
          _
        // Predicated region
        $region53: #{parallel_ffn.1} parent=39 // pred_check
          %p524 = pneg %p185
        $region54: #{parallel_ffn.1} parent=39 // pred_check_branch
          %526 = sbr.rel (%p524) target = $region56
        $region55: #{parallel_ffn.1} parent=39 // pred_region
          %527 = dma.done [#allocation4], 256
        $region56: #{parallel_ffn.1} parent=39 // pred_fallthru
          _
      $region40: #{parallel_ffn.1} parent=5 // pred_fallthru
        _
      %p528 = scmp.le.s32.totalorder 2, %s12
      // Predicated region
      $region57: #{parallel_ffn.1} parent=5 // pred_check
        %p529 = pneg %p528
      $region58: #{parallel_ffn.1} parent=5 // pred_check_branch
        %531 = sbr.rel (%p529) target = $region60
      $region59: #{parallel_ffn.1} parent=5 // pred_region
        %s532 = ssub.s32 %s12, 2
      $region60: #{parallel_ffn.1} parent=5 // pred_fallthru
        _
    $region6: #{parallel_ffn.1} parent=1 // loop_footer
      %s16 = sadd.s32 1, %s12
    $region7: #{parallel_ffn.1} parent=1 // loop_footer_branch
      %11 = sbr.rel target = $region3
    $region8: #{parallel_ffn.1} parent=1 // loop_exit
      _
    %533 = vsyncpa [#allocation4], 1
    %s534 = scalar_lea.sflag [#allocation4], 1
    %535 = vsyncpa %s534, 1

</llo_original>
